<compile_context>
chip_gen: v5e
topology: v5e:2x2
jax: 0.10.0
libtpu: 0.0.40
codegen_flags: <defaults>
</compile_context>

<pallas_src>
from functools import partial
from math import exp

import numpy as np
import jax
import jax.numpy as jnp
from jax.experimental import pallas as pl
from jax.experimental.pallas import tpu as pltpu

WINDOW_SIZE = 11
SIGMA = 1.5
LANE = 128


def _round_up(x, m):
    return (x + m - 1) // m * m


def _gaussian_1d(window_size, sigma):
    g = np.array(
        [exp(-((x - window_size // 2) ** 2) / (2.0 * sigma ** 2))
         for x in range(window_size)],
        dtype=np.float64,
    )
    return (g / g.sum()).astype(np.float32)


def _toeplitz_taps(H, W, ws, p, OWt, g1d):
    """T_h (OH,H) and block-diagonal T_w (p*W, OWt) s.t. conv(x) = T_h @ x @ T_w."""
    OH, OW = H - ws + 1, W - ws + 1
    th = np.zeros((OH, H), np.float32)
    for o in range(OH):
        th[o, o:o + ws] = g1d
    tw = np.zeros((W, OW), np.float32)
    for c in range(OW):
        tw[c:c + ws, c] = g1d
    twbd = np.zeros((p * W, OWt), np.float32)
    for i in range(p):
        twbd[i * W:(i + 1) * W, i * OW:(i + 1) * OW] = tw
    return th, twbd


def _vmem_limits():
    # Generation-aware budgeting: v5e/v6e have 128 MiB physical VMEM, v7x 64 MiB.
    try:
        cap = int(pltpu.get_tpu_info().vmem_capacity_bytes)
    except Exception:
        cap = 64 * 1024 * 1024            # conservative fallback (safe on all gens)
    limit = min(cap * 3 // 4, 96 * 1024 * 1024)   # 96 MiB v5e/v6e, 48 MiB v7x
    budget = int(limit * 0.7)                      # per-block footprint budget
    return int(limit), budget


def _block_vmem_bytes(p, r, H, W, OH, OW):
    """Honest per-block footprint: double-buffered inputs + all scratch/temps."""
    pW = p * W
    OWt = _round_up(p * OW, LANE)
    RW = r * OWt
    b = 2 * 2 * (r * H) * pW * 4           # x1, x2 f32 blocks, double-buffered
    b += 5 * (r * H) * pW * 2              # stacked conv-input scratch (bf16)
    b += 5 * (r * H) * OWt * 4             # W-pass f32 result
    b += H * 5 * RW * 2                    # lane-rearranged H-pass operand (bf16)
    b += OH * 5 * RW * 4                   # H-pass f32 result
    b += 6 * OH * RW * 4                   # epilogue temporaries
    b += 2 * (OH * H + pW * OWt) * 2 + 2 * RW * 4   # taps (bf16) + lane mask (f32)
    return b


def _pick_packing(B, H, W, OH, OW, vmem_budget, block_b=None, min_steps=3):
    """(p, r): p images packed along lanes, r stacked along rows; bt = p*r."""
    p_target = max(1, -(-LANE // W)) if W < LANE else 1
    if block_b is not None:
        bt = max(1, min(int(block_b), B))
        while B % bt:
            bt -= 1
        p = min(p_target, bt)
        while bt % p:
            p -= 1
        return p, bt // p
    # Lane-fill first (biggest lever for small W), constrained to divide B.
    p = min(p_target, B)
    while B % p:
        p -= 1
    groups = B // p
    # Grow r under the VMEM budget, but keep G = groups/r >= min_steps so the
    # input DMA overlaps the previous block's MXU work.
    r_cap = max(1, groups // min_steps)
    r = 1
    for cand in range(2, r_cap + 1):
        if groups % cand == 0 and _block_vmem_bytes(p, cand, H, W, OH, OW) <= vmem_budget:
            r = cand
    return p, r


def _make_ssim_kernel(p, r, H, W, OH, OW, OWt):
    RH = r * H           # rows per block
    RW = r * OWt         # per-channel lane width after the W-pass rearrange

    def kernel(c_ref, th_ref, tw_ref, mask_ref, x1_ref, x2_ref, out_ref,
               s_ref, cw_ref):
        C1 = c_ref[0]
        C2 = c_ref[1]

        x1 = x1_ref[0].astype(jnp.float32)      # (RH, p*W)
        x2 = x2_ref[0].astype(jnp.float32)

        # Stacked conv inputs written straight into VMEM scratch (no concat):
        # rows = [img1 | img2 | img1^2 | img2^2 | img1*img2].  Squares/products
        # are computed in f32, then cast to bf16 MXU operands.
        s_ref[0 * RH:1 * RH, :] = x1.astype(jnp.bfloat16)
        s_ref[1 * RH:2 * RH, :] = x2.astype(jnp.bfloat16)
        s_ref[2 * RH:3 * RH, :] = (x1 * x1).astype(jnp.bfloat16)
        s_ref[3 * RH:4 * RH, :] = (x2 * x2).astype(jnp.bfloat16)
        s_ref[4 * RH:5 * RH, :] = (x1 * x2).astype(jnp.bfloat16)

        # W-direction Gaussian conv: ONE dense MXU matmul against the
        # block-diagonal Toeplitz taps, lane-dense OWt output, f32 accumulate.
        cw = jnp.dot(s_ref[...], tw_ref[...],
                     preferred_element_type=jnp.float32)     # (5*RH, OWt)

        # Row-chunk -> lane-chunk rearrange so the H-pass is ONE matmul with a
        # huge lane (N) dimension instead of 5*r tiny batched matmuls.  Offsets
        # are multiples of H / OWt (OWt % 128 == 0), so the copies stay aligned.
        for k in range(5 * r):
            cw_ref[:, k * OWt:(k + 1) * OWt] = (
                cw[k * H:(k + 1) * H, :].astype(jnp.bfloat16))

        # H-direction conv: (OH, H) @ (H, 5*r*OWt) on the MXU.
        conv = jnp.dot(th_ref[...], cw_ref[...],
                       preferred_element_type=jnp.float32)   # (OH, 5*RW)

        mu1 = conv[:, 0 * RW:1 * RW]
        mu2 = conv[:, 1 * RW:2 * RW]
        e11 = conv[:, 2 * RW:3 * RW]
        e22 = conv[:, 3 * RW:4 * RW]
        e12 = conv[:, 4 * RW:5 * RW]

        # Fused SSIM-map epilogue in f32 (minimal live temporaries).
        mu1mu2 = mu1 * mu2
        mu1sq = mu1 * mu1
        mu2sq = mu2 * mu2
        num = (2.0 * mu1mu2 + C1) * (2.0 * (e12 - mu1mu2) + C2)
        den = (mu1sq + mu2sq + C1) * ((e11 - mu1sq) + (e22 - mu2sq) + C2)
        ssim_map = num / den

        # Zero the zero-padded lanes (they evaluate to ssim == 1 otherwise),
        # then emit this block's partial sum; the wrapper takes the global mean.
        out_ref[0, 0] = jnp.sum(ssim_map * mask_ref[...])

    return kernel


def _pack_lanes(x, G, r, p, H, W):
    # (B, H, W) -> (G, r*H, p*W): r images stacked along rows, p along lanes.
    if p == 1 and r == 1:
        return x.reshape(G, H, W)
    return (x.reshape(G, r, p, H, W)
             .transpose(0, 1, 3, 2, 4)
             .reshape(G, r * H, p * W))


@partial(jax.jit, static_argnames=("window_size", "block_b", "val_range"))
def ssim_pallas(img1, img2, window_size=WINDOW_SIZE, block_b=None, val_range=None):
    N, C, H, W = img1.shape
    assert img2.shape == img1.shape
    ws = min(window_size, H, W)
    OH, OW = H - ws + 1, W - ws + 1
    B = N * C

    x1 = img1.reshape(B, H, W).astype(jnp.float32)
    x2 = img2.reshape(B, H, W).astype(jnp.float32)

    # Dynamic range L (val_range=None branch of the torch code).  A per-tile
    # kernel cannot see a global reduction, so it stays here; inside this jit
    # the two reductions over the same operand fuse into one HBM sweep.
    if val_range is None:
        max_val = jnp.where(jnp.max(x1) > 128.0, 255.0, 1.0)
        min_val = jnp.where(jnp.min(x1) < -0.5, -1.0, 0.0)
        L = max_val - min_val
        consts = jnp.stack([(0.01 * L) ** 2, (0.03 * L) ** 2]).astype(jnp.float32)
    else:
        L = float(val_range)
        consts = jnp.array([(0.01 * L) ** 2, (0.03 * L) ** 2], jnp.float32)

    vmem_limit, vmem_budget = _vmem_limits()
    p, r = _pick_packing(B, H, W, OH, OW, vmem_budget, block_b)
    bt = p * r
    G = B // bt
    OWt = _round_up(p * OW, LANE)
    RW = r * OWt

    g1d = _gaussian_1d(ws, SIGMA)
    th_np, twbd_np = _toeplitz_taps(H, W, ws, p, OWt, g1d)
    th = jnp.asarray(th_np, dtype=jnp.bfloat16)          # (OH, H)
    twbd = jnp.asarray(twbd_np, dtype=jnp.bfloat16)      # (p*W, OWt)
    mask_row = np.zeros((1, OWt), np.float32)
    mask_row[0, :p * OW] = 1.0
    mask = jnp.asarray(np.tile(mask_row, (1, r)))        # (1, RW)

    x1p = _pack_lanes(x1, G, r, p, H, W)
    x2p = _pack_lanes(x2, G, r, p, H, W)

    kernel = _make_ssim_kernel(p, r, H, W, OH, OW, OWt)

    partial_sums = pl.pallas_call(
        kernel,
        out_shape=jax.ShapeDtypeStruct((G, 1), jnp.float32),
        grid=(G,),
        in_specs=[
            # C1, C2 scalars -> SMEM, available every grid step.
            pl.BlockSpec(memory_space=pltpu.MemorySpace.SMEM),
            # Tap matrices + lane mask: constant index_map -> the pipeline keeps
            # one resident copy and elides the per-step re-DMA.
            pl.BlockSpec((OH, H), lambda g: (0, 0)),
            pl.BlockSpec((p * W, OWt), lambda g: (0, 0)),
            pl.BlockSpec((1, RW), lambda g: (0, 0)),
            # Image blocks (r*H rows, p*W lanes), tiled over the fused N*C axis.
            pl.BlockSpec((1, r * H, p * W), lambda g: (g, 0, 0)),
            pl.BlockSpec((1, r * H, p * W), lambda g: (g, 0, 0)),
        ],
        out_specs=pl.BlockSpec((1, 1), lambda g: (g, 0),
                               memory_space=pltpu.MemorySpace.SMEM),
        scratch_shapes=[
            pltpu.VMEM((5 * r * H, p * W), jnp.bfloat16),   # stacked conv inputs
            pltpu.VMEM((H, 5 * RW), jnp.bfloat16),          # H-pass RHS operand
        ],
        compiler_params=pltpu.CompilerParams(
            dimension_semantics=("parallel",),
            vmem_limit_bytes=vmem_limit,
        ),
    )(consts, th, twbd, mask, x1p, x2p)

    # size_average=True -> mean over the full N*C*OH*OW ssim_map.
    return jnp.sum(partial_sums) / float(B * OH * OW)


def ssim_ref_jax(img1, img2, window_size=WINDOW_SIZE):
    # Pure-JAX f32 reference mirroring the torch code (verification only).
    N, C, H, W = img1.shape
    ws = min(window_size, H, W)
    g = jnp.asarray(_gaussian_1d(ws, SIGMA))
    w2d = jnp.outer(g, g)
    window = jnp.broadcast_to(w2d, (C, 1, ws, ws)).astype(jnp.float32)

    def conv(x):
        return jax.lax.conv_general_dilated(
            x, window, window_strides=(1, 1), padding="VALID",
            dimension_numbers=("NCHW", "OIHW", "NCHW"),
            feature_group_count=C)

    max_val = jnp.where(jnp.max(img1) > 128.0, 255.0, 1.0)
    min_val = jnp.where(jnp.min(img1) < -0.5, -1.0, 0.0)
    Lr = max_val - min_val
    C1 = (0.01 * Lr) ** 2
    C2 = (0.03 * Lr) ** 2

    mu1 = conv(img1)
    mu2 = conv(img2)
    mu1_sq = mu1 * mu1
    mu2_sq = mu2 * mu2
    mu1_mu2 = mu1 * mu2
    sigma1_sq = conv(img1 * img1) - mu1_sq
    sigma2_sq = conv(img2 * img2) - mu2_sq
    sigma12 = conv(img1 * img2) - mu1_mu2
    v1 = 2.0 * sigma12 + C2
    v2 = sigma1_sq + sigma2_sq + C2
    ssim_map = (2.0 * mu1_mu2 + C1) * v1 / ((mu1_sq + mu2_sq + C1) * v2)
    return jnp.mean(ssim_map)


if __name__ == "__main__":
    key = jax.random.PRNGKey(0)
    k1, k2 = jax.random.split(key)
    # Small shapes consistent with the module: N=2, C=4, H=W=16 (11x11 window).
    img1 = jax.random.normal(k1, (2, 4, 16, 16), dtype=jnp.float32)
    img2 = jax.random.normal(k2, (2, 4, 16, 16), dtype=jnp.float32)

    ref = ssim_ref_jax(img1, img2)

    # Auto config: packs all 8 images along lanes (128-lane dense blocks).
    out_auto = ssim_pallas(img1, img2)
    jax.block_until_ready(out_auto)

    # Explicit small block: 4-step grid, exercises tiling + software pipelining.
    out_tiled = ssim_pallas(img1, img2, block_b=2)
    jax.block_until_ready(out_tiled)

    # bf16 MXU operands (f32 accumulate / f32 epilogue) govern the tolerance;
    # SSIM values live in [-1, 1] so 5e-3 absolute is a tight-enough check.
    assert jnp.allclose(out_auto, ref, atol=5e-3), (float(out_auto), float(ref))
    assert jnp.allclose(out_tiled, ref, atol=5e-3), (float(out_tiled), float(ref))
    print("KERNEL_OK")
</pallas_src>

<mosaic_0001>
module attributes {stable_mosaic.version = 11 : i64} {
  func.func @kernel(%arg0: i32, %arg1: memref<2xf32, #tpu.memory_space<smem>>, %arg2: memref<6x16xbf16, #tpu.memory_space<vmem>>, %arg3: memref<128x128xbf16, #tpu.memory_space<vmem>>, %arg4: memref<1x128xf32, #tpu.memory_space<vmem>>, %arg5: memref<1x16x128xf32, #tpu.memory_space<vmem>>, %arg6: memref<1x16x128xf32, #tpu.memory_space<vmem>>, %arg7: memref<1x1xf32, #tpu.memory_space<smem>>, %arg8: memref<80x128xbf16, #tpu.memory_space<vmem>>, %arg9: memref<16x640xbf16, #tpu.memory_space<vmem>>) attributes {dimension_semantics = [#tpu.dimension_semantics<parallel>], iteration_bounds = array<i64: 1>, scalar_prefetch = 0 : i64, scratch_operands = 2 : i64, tpu.core_type = #tpu.core_type<tc>, window_params = [{transform_indices = @transform_0, window_bounds = array<i64: 2>}, {pipeline_mode = #tpu.pipeline_mode<synchronous>, transform_indices = @transform_1, window_bounds = array<i64: 6, 16>}, {pipeline_mode = #tpu.pipeline_mode<synchronous>, transform_indices = @transform_2, window_bounds = array<i64: 128, 128>}, {pipeline_mode = #tpu.pipeline_mode<synchronous>, transform_indices = @transform_3, window_bounds = array<i64: 1, 128>}, {transform_indices = @transform_4, window_bounds = array<i64: 1, 16, 128>}, {transform_indices = @transform_5, window_bounds = array<i64: 1, 16, 128>}, {transform_indices = @transform_6, window_bounds = array<i64: 1, 1>}]} {
    %c0 = arith.constant 0 : index
    %0 = memref.load %arg1[%c0] : memref<2xf32, #tpu.memory_space<smem>>
    %c1 = arith.constant 1 : index
    %1 = memref.load %arg1[%c1] : memref<2xf32, #tpu.memory_space<smem>>
    %c0_0 = arith.constant 0 : index
    %c0_1 = arith.constant 0 : index
    %c0_2 = arith.constant 0 : index
    %2 = vector.load %arg5[%c0_0, %c0_1, %c0_2] : memref<1x16x128xf32, #tpu.memory_space<vmem>>, vector<1x16x128xf32>
    %3 = vector.shape_cast %2 : vector<1x16x128xf32> to vector<16x128xf32>
    %c0_3 = arith.constant 0 : index
    %c0_4 = arith.constant 0 : index
    %c0_5 = arith.constant 0 : index
    %4 = vector.load %arg6[%c0_3, %c0_4, %c0_5] : memref<1x16x128xf32, #tpu.memory_space<vmem>>, vector<1x16x128xf32>
    %5 = vector.shape_cast %4 : vector<1x16x128xf32> to vector<16x128xf32>
    %6 = arith.truncf %3 : vector<16x128xf32> to vector<16x128xbf16>
    %c0_6 = arith.constant 0 : index
    %c0_7 = arith.constant 0 : index
    %7 = vector.load %arg8[%c0_6, %c0_7] : memref<80x128xbf16, #tpu.memory_space<vmem>>, vector<16x128xbf16>
    tpu.vector_store %arg8[%c0_6, %c0_7], %6 {strides = array<i32>} : memref<80x128xbf16, #tpu.memory_space<vmem>>, vector<16x128xbf16>,
    %8 = arith.truncf %5 : vector<16x128xf32> to vector<16x128xbf16>
    %c16 = arith.constant 16 : index
    %c0_8 = arith.constant 0 : index
    %9 = vector.load %arg8[%c16, %c0_8] : memref<80x128xbf16, #tpu.memory_space<vmem>>, vector<16x128xbf16>
    tpu.vector_store %arg8[%c16, %c0_8], %8 {strides = array<i32>} : memref<80x128xbf16, #tpu.memory_space<vmem>>, vector<16x128xbf16>,
    %10 = arith.mulf %3, %3 : vector<16x128xf32>
    %11 = arith.truncf %10 : vector<16x128xf32> to vector<16x128xbf16>
    %c32 = arith.constant 32 : index
    %c0_9 = arith.constant 0 : index
    %12 = vector.load %arg8[%c32, %c0_9] : memref<80x128xbf16, #tpu.memory_space<vmem>>, vector<16x128xbf16>
    tpu.vector_store %arg8[%c32, %c0_9], %11 {strides = array<i32>} : memref<80x128xbf16, #tpu.memory_space<vmem>>, vector<16x128xbf16>,
    %13 = arith.mulf %5, %5 : vector<16x128xf32>
    %14 = arith.truncf %13 : vector<16x128xf32> to vector<16x128xbf16>
    %c48 = arith.constant 48 : index
    %c0_10 = arith.constant 0 : index
    %15 = vector.load %arg8[%c48, %c0_10] : memref<80x128xbf16, #tpu.memory_space<vmem>>, vector<16x128xbf16>
    tpu.vector_store %arg8[%c48, %c0_10], %14 {strides = array<i32>} : memref<80x128xbf16, #tpu.memory_space<vmem>>, vector<16x128xbf16>,
    %16 = arith.mulf %3, %5 : vector<16x128xf32>
    %17 = arith.truncf %16 : vector<16x128xf32> to vector<16x128xbf16>
    %c64 = arith.constant 64 : index
    %c0_11 = arith.constant 0 : index
    %18 = vector.load %arg8[%c64, %c0_11] : memref<80x128xbf16, #tpu.memory_space<vmem>>, vector<16x128xbf16>
    tpu.vector_store %arg8[%c64, %c0_11], %17 {strides = array<i32>} : memref<80x128xbf16, #tpu.memory_space<vmem>>, vector<16x128xbf16>,
    %c0_12 = arith.constant 0 : index
    %c0_13 = arith.constant 0 : index
    %19 = vector.load %arg8[%c0_12, %c0_13] : memref<80x128xbf16, #tpu.memory_space<vmem>>, vector<80x128xbf16>
    %c0_14 = arith.constant 0 : index
    %c0_15 = arith.constant 0 : index
    %20 = vector.load %arg3[%c0_14, %c0_15] : memref<128x128xbf16, #tpu.memory_space<vmem>>, vector<128x128xbf16>
    %cst = arith.constant dense<0.000000e+00> : vector<80x128xf32>
    %21 = tpu.matmul %19, %20, %cst {dimension_numbers = #tpu.dot_dimension_numbers<[1], [0], [0], [1], [0, 0, 1, 1], [], []>} : vector<80x128xbf16>, vector<128x128xbf16>, vector<80x128xf32> -> vector<80x128xf32>
    %22 = vector.extract_strided_slice %21 {offsets = [0, 0], sizes = [16, 128], strides = [1, 1]} : vector<80x128xf32> to vector<16x128xf32>
    %23 = arith.truncf %22 : vector<16x128xf32> to vector<16x128xbf16>
    %c0_16 = arith.constant 0 : index
    %c0_17 = arith.constant 0 : index
    %24 = vector.load %arg9[%c0_16, %c0_17] : memref<16x640xbf16, #tpu.memory_space<vmem>>, vector<16x128xbf16>
    tpu.vector_store %arg9[%c0_16, %c0_17], %23 {strides = array<i32>} : memref<16x640xbf16, #tpu.memory_space<vmem>>, vector<16x128xbf16>,
    %25 = vector.extract_strided_slice %21 {offsets = [16, 0], sizes = [16, 128], strides = [1, 1]} : vector<80x128xf32> to vector<16x128xf32>
    %26 = arith.truncf %25 : vector<16x128xf32> to vector<16x128xbf16>
    %c0_18 = arith.constant 0 : index
    %c128 = arith.constant 128 : index
    %27 = vector.load %arg9[%c0_18, %c128] : memref<16x640xbf16, #tpu.memory_space<vmem>>, vector<16x128xbf16>
    tpu.vector_store %arg9[%c0_18, %c128], %26 {strides = array<i32>} : memref<16x640xbf16, #tpu.memory_space<vmem>>, vector<16x128xbf16>,
    %28 = vector.extract_strided_slice %21 {offsets = [32, 0], sizes = [16, 128], strides = [1, 1]} : vector<80x128xf32> to vector<16x128xf32>
    %29 = arith.truncf %28 : vector<16x128xf32> to vector<16x128xbf16>
    %c0_19 = arith.constant 0 : index
    %c256 = arith.constant 256 : index
    %30 = vector.load %arg9[%c0_19, %c256] : memref<16x640xbf16, #tpu.memory_space<vmem>>, vector<16x128xbf16>
    tpu.vector_store %arg9[%c0_19, %c256], %29 {strides = array<i32>} : memref<16x640xbf16, #tpu.memory_space<vmem>>, vector<16x128xbf16>,
    %31 = vector.extract_strided_slice %21 {offsets = [48, 0], sizes = [16, 128], strides = [1, 1]} : vector<80x128xf32> to vector<16x128xf32>
    %32 = arith.truncf %31 : vector<16x128xf32> to vector<16x128xbf16>
    %c0_20 = arith.constant 0 : index
    %c384 = arith.constant 384 : index
    %33 = vector.load %arg9[%c0_20, %c384] : memref<16x640xbf16, #tpu.memory_space<vmem>>, vector<16x128xbf16>
    tpu.vector_store %arg9[%c0_20, %c384], %32 {strides = array<i32>} : memref<16x640xbf16, #tpu.memory_space<vmem>>, vector<16x128xbf16>,
    %34 = vector.extract_strided_slice %21 {offsets = [64, 0], sizes = [16, 128], strides = [1, 1]} : vector<80x128xf32> to vector<16x128xf32>
    %35 = arith.truncf %34 : vector<16x128xf32> to vector<16x128xbf16>
    %c0_21 = arith.constant 0 : index
    %c512 = arith.constant 512 : index
    %36 = vector.load %arg9[%c0_21, %c512] : memref<16x640xbf16, #tpu.memory_space<vmem>>, vector<16x128xbf16>
    tpu.vector_store %arg9[%c0_21, %c512], %35 {strides = array<i32>} : memref<16x640xbf16, #tpu.memory_space<vmem>>, vector<16x128xbf16>,
    %c0_22 = arith.constant 0 : index
    %c0_23 = arith.constant 0 : index
    %37 = vector.load %arg2[%c0_22, %c0_23] : memref<6x16xbf16, #tpu.memory_space<vmem>>, vector<6x16xbf16>
    %c0_24 = arith.constant 0 : index
    %c0_25 = arith.constant 0 : index
    %38 = vector.load %arg9[%c0_24, %c0_25] : memref<16x640xbf16, #tpu.memory_space<vmem>>, vector<16x640xbf16>
    %cst_26 = arith.constant dense<0.000000e+00> : vector<6x640xf32>
    %39 = tpu.matmul %37, %38, %cst_26 {dimension_numbers = #tpu.dot_dimension_numbers<[1], [0], [0], [1], [0, 0, 1, 1], [], []>} : vector<6x16xbf16>, vector<16x640xbf16>, vector<6x640xf32> -> vector<6x640xf32>
    %40 = vector.extract_strided_slice %39 {offsets = [0, 0], sizes = [6, 128], strides = [1, 1]} : vector<6x640xf32> to vector<6x128xf32>
    %41 = vector.extract_strided_slice %39 {offsets = [0, 128], sizes = [6, 128], strides = [1, 1]} : vector<6x640xf32> to vector<6x128xf32>
    %42 = vector.extract_strided_slice %39 {offsets = [0, 256], sizes = [6, 128], strides = [1, 1]} : vector<6x640xf32> to vector<6x128xf32>
    %43 = vector.extract_strided_slice %39 {offsets = [0, 384], sizes = [6, 128], strides = [1, 1]} : vector<6x640xf32> to vector<6x128xf32>
    %44 = vector.extract_strided_slice %39 {offsets = [0, 512], sizes = [6, 128], strides = [1, 1]} : vector<6x640xf32> to vector<6x128xf32>
    %45 = arith.mulf %40, %41 : vector<6x128xf32>
    %46 = arith.mulf %40, %40 : vector<6x128xf32>
    %47 = arith.mulf %41, %41 : vector<6x128xf32>
    %cst_27 = arith.constant 2.000000e+00 : f32
    %48 = vector.broadcast %cst_27 : f32 to vector<6x128xf32>
    %49 = arith.mulf %48, %45 : vector<6x128xf32>
    %50 = vector.broadcast %0 : f32 to vector<6x128xf32>
    %51 = arith.addf %49, %50 : vector<6x128xf32>
    %52 = arith.subf %44, %45 : vector<6x128xf32>
    %cst_28 = arith.constant 2.000000e+00 : f32
    %53 = vector.broadcast %cst_28 : f32 to vector<6x128xf32>
    %54 = arith.mulf %53, %52 : vector<6x128xf32>
    %55 = vector.broadcast %1 : f32 to vector<6x128xf32>
    %56 = arith.addf %54, %55 : vector<6x128xf32>
    %57 = arith.mulf %51, %56 : vector<6x128xf32>
    %58 = arith.addf %46, %47 : vector<6x128xf32>
    %59 = vector.broadcast %0 : f32 to vector<6x128xf32>
    %60 = arith.addf %58, %59 : vector<6x128xf32>
    %61 = arith.subf %42, %46 : vector<6x128xf32>
    %62 = arith.subf %43, %47 : vector<6x128xf32>
    %63 = arith.addf %61, %62 : vector<6x128xf32>
    %64 = vector.broadcast %1 : f32 to vector<6x128xf32>
    %65 = arith.addf %63, %64 : vector<6x128xf32>
    %66 = arith.mulf %60, %65 : vector<6x128xf32>
    %67 = arith.divf %57, %66 : vector<6x128xf32>
    %c0_29 = arith.constant 0 : index
    %c0_30 = arith.constant 0 : index
    %68 = vector.load %arg4[%c0_29, %c0_30] : memref<1x128xf32, #tpu.memory_space<vmem>>, vector<1x128xf32>
    %69 = vector.broadcast %68 : vector<1x128xf32> to vector<6x128xf32>
    %70 = arith.mulf %67, %69 : vector<6x128xf32>
    %71 = vector.shape_cast %70 : vector<6x128xf32> to vector<1x6x128xf32>
    %cst_31 = arith.constant dense<0.000000e+00> : vector<1xf32>
    %72 = vector.multi_reduction <add>, %71, %cst_31 [1, 2] : vector<1x6x128xf32> to vector<1xf32>
    %73 = vector.shape_cast %72 : vector<1xf32> to vector<1x1x1xf32>
    %74 = vector.extract %73[0, 0, 0] : f32 from vector<1x1x1xf32>
    %c0_32 = arith.constant 0 : index
    %c0_33 = arith.constant 0 : index
    %75 = memref.load %arg7[%c0_32, %c0_33] : memref<1x1xf32, #tpu.memory_space<smem>>
    memref.store %74, %arg7[%c0_32, %c0_33] : memref<1x1xf32, #tpu.memory_space<smem>>
    return
  }
  func.func @transform_0(%arg0: i32) -> i32 {
    %c0_i32 = arith.constant 0 : i32
    %c0_i32_0 = arith.constant 0 : i32
    return %c0_i32 : i32
  }
  func.func @transform_1(%arg0: i32) -> (i32, i32) {
    %c0_i32 = arith.constant 0 : i32
    %c0_i32_0 = arith.constant 0 : i32
    %c0_i32_1 = arith.constant 0 : i32
    return %c0_i32, %c0_i32_0 : i32, i32
  }
  func.func @transform_2(%arg0: i32) -> (i32, i32) {
    %c0_i32 = arith.constant 0 : i32
    %c0_i32_0 = arith.constant 0 : i32
    %c0_i32_1 = arith.constant 0 : i32
    return %c0_i32, %c0_i32_0 : i32, i32
  }
  func.func @transform_3(%arg0: i32) -> (i32, i32) {
    %c0_i32 = arith.constant 0 : i32
    %c0_i32_0 = arith.constant 0 : i32
    %c0_i32_1 = arith.constant 0 : i32
    return %c0_i32, %c0_i32_0 : i32, i32
  }
  func.func @transform_4(%arg0: i32) -> (i32, i32, i32) {
    %c0_i32 = arith.constant 0 : i32
    %c0_i32_0 = arith.constant 0 : i32
    %c0_i32_1 = arith.constant 0 : i32
    return %arg0, %c0_i32, %c0_i32_0 : i32, i32, i32
  }
  func.func @transform_5(%arg0: i32) -> (i32, i32, i32) {
    %c0_i32 = arith.constant 0 : i32
    %c0_i32_0 = arith.constant 0 : i32
    %c0_i32_1 = arith.constant 0 : i32
    return %arg0, %c0_i32, %c0_i32_0 : i32, i32, i32
  }
  func.func @transform_6(%arg0: i32) -> (i32, i32) {
    %c0_i32 = arith.constant 0 : i32
    %c0_i32_0 = arith.constant 0 : i32
    return %arg0, %c0_i32 : i32, i32
  }
}

</mosaic_0001>

<llo_original>
// kernel: ssim_pallas.1
$region0: #{ssim_pallas.1}
  #allocation0 [shape = 'u32[]', space=smem, size = 0x4, offset = 0x4, fixed_abs, tag = 'smem constant byte address 0x4 - core index']
  #allocation1 [shape = 'u32[72,128]{1,0:T(1,128)}', space=vmem, size = 0x9000, scoped, tag = 'internal scratch']
  #allocation2 [shape = 'bf16[80,128]{1,0:T(8,128)(2,1)}', space=vmem, size = 0x5000, scoped, tag = 'scratch operand']
  #allocation3 [shape = 'bf16[16,640]{1,0:T(8,128)(2,1)}', space=vmem, size = 0x5000, scoped, tag = 'scratch operand']
  %s0 = inlined_call_operand.vmem [shape: f32[2], index: 0, kind: input, shape index: {}]
  %s1 = inlined_call_operand.vmem [shape: bf16[6,16], index: 1, kind: input, shape index: {}]
  %s2 = inlined_call_operand.vmem [shape: bf16[128,128], index: 2, kind: input, shape index: {}]
  %s3 = inlined_call_operand.vmem [shape: f32[1,128], index: 3, kind: input, shape index: {}]
  %s4 = inlined_call_operand.vmem [shape: f32[1,16,128], index: 4, kind: input, shape index: {}]
  %s5 = inlined_call_operand.vmem [shape: f32[1,16,128], index: 5, kind: input, shape index: {}]
  %s6 = inlined_call_operand.hbm [shape: f32[1,1], index: 6, kind: output, shape index: {}]
  %s7 = sld [smem:[#allocation0]]
  $region38: #{ssim_pallas.1} parent=0
    _
  %s9 = ssub.s32 1, %s7
  %s10 = scalar_select 0, %s9, %s7
  $region1: #{ssim_pallas.1} parent=0
    #allocation4 [shape = 'u8[512]{0}', space=smem, size = 0x200, scoped, tag = 'input window, operand 0, single buffered']
    #allocation5 [shape = 's32[1]{0}', space=sflag, size = 0x4, scoped, tag = 'scoped memory for ssim_pallas.1']
    #allocation6 [shape = 's32[1]{0}', space=sflag, size = 0x4, scoped, tag = 'scoped memory for ssim_pallas.1']
    #allocation7 [shape = 'u8[512]{0}', space=smem, size = 0x200, scoped, tag = 'output window, operand 0, single buffered']
    %11 = vsyncpa [#allocation6], 0
    %12 = vsyncpa [#allocation5], 0
    // Predicated region
    $region2: #{ssim_pallas.1} parent=1 // pred_check
      _
    $region3: #{ssim_pallas.1} parent=1 // pred_check_branch
      %14 = sbr.rel (0) target = $region5
    $region4: #{ssim_pallas.1} parent=1 // pred_region
      %16 = vsyncadd [#allocation6], 0
      %s18 = sshll.u32 %s0, 4
      %s19 = int_to_ptr.vmem [resolvable:$true] %s18
      %21 = dma.vmem_to_smem %s19, 16, [#allocation4], [#allocation6]
    $region5: #{ssim_pallas.1} parent=1 // pred_fallthru
      _
    // Predicated region
    $region6: #{ssim_pallas.1} parent=1 // pred_check
      _
    $region7: #{ssim_pallas.1} parent=1 // pred_check_branch
      %23 = sbr.rel (0) target = $region9
    $region8: #{ssim_pallas.1} parent=1 // pred_region
      _
    $region9: #{ssim_pallas.1} parent=1 // pred_fallthru
      _
    // Predicated region
    $region10: #{ssim_pallas.1} parent=1 // pred_check
      _
    $region11: #{ssim_pallas.1} parent=1 // pred_check_branch
      %25 = sbr.rel (0) target = $region13
    $region12: #{ssim_pallas.1} parent=1 // pred_region
      _
    $region13: #{ssim_pallas.1} parent=1 // pred_fallthru
      _
    // Predicated region
    $region14: #{ssim_pallas.1} parent=1 // pred_check
      _
    $region15: #{ssim_pallas.1} parent=1 // pred_check_branch
      %27 = sbr.rel (0) target = $region17
    $region16: #{ssim_pallas.1} parent=1 // pred_region
      _
    $region17: #{ssim_pallas.1} parent=1 // pred_fallthru
      _
    // Predicated region
    $region18: #{ssim_pallas.1} parent=1 // pred_check
      _
    $region19: #{ssim_pallas.1} parent=1 // pred_check_branch
      %29 = sbr.rel (0) target = $region21
    $region20: #{ssim_pallas.1} parent=1 // pred_region
      _
    $region21: #{ssim_pallas.1} parent=1 // pred_fallthru
      _
    // Predicated region
    $region22: #{ssim_pallas.1} parent=1 // pred_check
      _
    $region23: #{ssim_pallas.1} parent=1 // pred_check_branch
      %31 = sbr.rel (0) target = $region25
    $region24: #{ssim_pallas.1} parent=1 // pred_region
      _
    $region25: #{ssim_pallas.1} parent=1 // pred_fallthru
      _
    // Predicated region
    $region26: #{ssim_pallas.1} parent=1 // pred_check
      _
    $region27: #{ssim_pallas.1} parent=1 // pred_check_branch
      %33 = sbr.rel (0) target = $region29
    $region28: #{ssim_pallas.1} parent=1 // pred_region
      %35 = dma.done [#allocation6], 16
    $region29: #{ssim_pallas.1} parent=1 // pred_fallthru
      _
    %36 = sfence
    %s38 = sld [smem:[#allocation4]]
    %s39 = sld [smem:[#allocation4 + $0x1]]
    %v40 = vld [vmem:[%s4] sm:$0xff]
    %v41 = vld [vmem:[%s4 + $0x8] sm:$0xff]
    %v42 = vld [vmem:[%s5] sm:$0xff]
    %v43 = vld [vmem:[%s5 + $0x8] sm:$0xff]
    %v44 = vpack.c.bf16 %v40, %v40
    %v45 = vpack.c.bf16 %v41, %v41
    %46 = vst [vmem:[#allocation2] sm:$0xf] %v44
    %47 = vst [vmem:[#allocation2 + $0x4] sm:$0xf] %v45
    %v48 = vpack.c.bf16 %v42, %v42
    %v49 = vpack.c.bf16 %v43, %v43
    %50 = vst [vmem:[#allocation2 + $0x8] sm:$0xf] %v48
    %51 = vst [vmem:[#allocation2 + $0xc] sm:$0xf] %v49
    %v52 = vmul.f32 %v40, %v40
    %v53 = vmul.f32 %v41, %v41
    %v54 = vpack.c.bf16 %v52, %v52
    %v55 = vpack.c.bf16 %v53, %v53
    %56 = vst [vmem:[#allocation2 + $0x10] sm:$0xf] %v54
    %57 = vst [vmem:[#allocation2 + $0x14] sm:$0xf] %v55
    %v58 = vmul.f32 %v42, %v42
    %v59 = vmul.f32 %v43, %v43
    %v60 = vpack.c.bf16 %v58, %v58
    %v61 = vpack.c.bf16 %v59, %v59
    %62 = vst [vmem:[#allocation2 + $0x18] sm:$0xf] %v60
    %63 = vst [vmem:[#allocation2 + $0x1c] sm:$0xf] %v61
    %v64 = vmul.f32 %v40, %v42
    %v65 = vmul.f32 %v41, %v43
    %v66 = vpack.c.bf16 %v64, %v64
    %v67 = vpack.c.bf16 %v65, %v65
    %68 = vst [vmem:[#allocation2 + $0x20] sm:$0xf] %v66
    %69 = vst [vmem:[#allocation2 + $0x24] sm:$0xf] %v67
    %v70 = vld [vmem:[#allocation2] sm:$0xf]
    %v71 = vld [vmem:[#allocation2 + $0x4] sm:$0xf]
    %v72 = vld [vmem:[#allocation2 + $0x8] sm:$0xf]
    %v73 = vld [vmem:[#allocation2 + $0xc] sm:$0xf]
    %v74 = vld [vmem:[#allocation2 + $0x10] sm:$0xf]
    %v75 = vld [vmem:[#allocation2 + $0x14] sm:$0xf]
    %v76 = vld [vmem:[#allocation2 + $0x18] sm:$0xf]
    %v77 = vld [vmem:[#allocation2 + $0x1c] sm:$0xf]
    %v78 = vld [vmem:[#allocation2 + $0x20] sm:$0xf]
    %v79 = vld [vmem:[#allocation2 + $0x24] sm:$0xf]
    %v80 = vld [vmem:[%s2] sm:$0xf]
    %v81 = vld [vmem:[%s2 + $0x4] sm:$0xf]
    %v82 = vld [vmem:[%s2 + $0x8] sm:$0xf]
    %v83 = vld [vmem:[%s2 + $0xc] sm:$0xf]
    %v84 = vld [vmem:[%s2 + $0x10] sm:$0xf]
    %v85 = vld [vmem:[%s2 + $0x14] sm:$0xf]
    %v86 = vld [vmem:[%s2 + $0x18] sm:$0xf]
    %v87 = vld [vmem:[%s2 + $0x1c] sm:$0xf]
    %v88 = vld [vmem:[%s2 + $0x20] sm:$0xf]
    %v89 = vld [vmem:[%s2 + $0x24] sm:$0xf]
    %v90 = vld [vmem:[%s2 + $0x28] sm:$0xf]
    %v91 = vld [vmem:[%s2 + $0x2c] sm:$0xf]
    %v92 = vld [vmem:[%s2 + $0x30] sm:$0xf]
    %v93 = vld [vmem:[%s2 + $0x34] sm:$0xf]
    %v94 = vld [vmem:[%s2 + $0x38] sm:$0xf]
    %v95 = vld [vmem:[%s2 + $0x3c] sm:$0xf]
    %v106 = vunpack.c.l.b16 %v70
    %v107 = vunpack.c.l.b16 %v71
    %v108 = vunpack.c.l.b16 %v72
    %v109 = vunpack.c.l.b16 %v73
    %v110 = vunpack.c.l.b16 %v74
    %v111 = vunpack.c.l.b16 %v75
    %v112 = vunpack.c.l.b16 %v76
    %v113 = vunpack.c.l.b16 %v77
    %v114 = vunpack.c.l.b16 %v78
    %v115 = vunpack.c.l.b16 %v79
    %v116 = vpack.c.b16 %v107, %v106
    %v117 = vpack.c.b16 %v109, %v108
    %v118 = vpack.c.b16 %v111, %v110
    %v119 = vpack.c.b16 %v113, %v112
    %v120 = vpack.c.b16 %v115, %v114
    %v142 = vunpack.c.l.b16 %v80
    %v143 = vunpack.c.l.b16 %v81
    %v144 = vunpack.c.l.b16 %v82
    %v145 = vunpack.c.l.b16 %v83
    %v146 = vunpack.c.l.b16 %v84
    %v147 = vunpack.c.l.b16 %v85
    %v148 = vunpack.c.l.b16 %v86
    %v149 = vunpack.c.l.b16 %v87
    %v150 = vunpack.c.l.b16 %v88
    %v151 = vunpack.c.l.b16 %v89
    %v152 = vunpack.c.l.b16 %v90
    %v153 = vunpack.c.l.b16 %v91
    %v154 = vunpack.c.l.b16 %v92
    %v155 = vunpack.c.l.b16 %v93
    %v156 = vunpack.c.l.b16 %v94
    %v157 = vunpack.c.l.b16 %v95
    %v158 = vpack.c.b16 %v143, %v142
    %v159 = vpack.c.b16 %v145, %v144
    %v160 = vpack.c.b16 %v147, %v146
    %v161 = vpack.c.b16 %v149, %v148
    %v162 = vpack.c.b16 %v151, %v150
    %v163 = vpack.c.b16 %v153, %v152
    %v164 = vpack.c.b16 %v155, %v154
    %v165 = vpack.c.b16 %v157, %v156
    %174 = vmatpush.bf16.msra.mxu0 %v165
    %175 = vmatpush.bf16.msra.mxu0 %v164
    %176 = vmatpush.bf16.msra.mxu0 %v163
    %177 = vmatpush.bf16.msra.mxu0 %v162
    %178 = vmatpush.bf16.msra.mxu0 %v161
    %179 = vmatpush.bf16.msra.mxu0 %v160
    %180 = vmatpush.bf16.msra.mxu0 %v159
    %181 = vmatpush.bf16.msra.mxu0 %v158
    %182 = vmatmul.bf16.gmra.mxu0 %v116
    %v183 = vpop.f32.mrf.mxu0
    %v184 = vadd.f32 0.0, %v183
    %v185 = vpop.f32.mrf.mxu0
    %v186 = vadd.f32 0.0, %v185
    %187 = vmatmul.bf16.gmra.mxu0 %v117
    %v188 = vpop.f32.mrf.mxu0
    %v189 = vadd.f32 0.0, %v188
    %v190 = vpop.f32.mrf.mxu0
    %v191 = vadd.f32 0.0, %v190
    %192 = vmatmul.bf16.gmra.mxu0 %v118
    %v193 = vpop.f32.mrf.mxu0
    %v194 = vadd.f32 0.0, %v193
    %v195 = vpop.f32.mrf.mxu0
    %v196 = vadd.f32 0.0, %v195
    %197 = vmatmul.bf16.gmra.mxu0 %v119
    %v198 = vpop.f32.mrf.mxu0
    %v199 = vadd.f32 0.0, %v198
    %v200 = vpop.f32.mrf.mxu0
    %v201 = vadd.f32 0.0, %v200
    %202 = vmatmul.bf16.gmra.mxu0 %v120
    %v203 = vpop.f32.mrf.mxu0
    %v204 = vadd.f32 0.0, %v203
    %v205 = vpop.f32.mrf.mxu0
    %v206 = vadd.f32 0.0, %v205
    %207 = vdwg.mxu0
    %v208 = vpack.c.bf16 %v184, %v184
    %v209 = vpack.c.bf16 %v186, %v186
    %210 = vst [vmem:[#allocation3] sm:$0xf] %v208
    %211 = vst [vmem:[#allocation3 + $0x14] sm:$0xf] %v209
    %v212 = vpack.c.bf16 %v189, %v189
    %v213 = vpack.c.bf16 %v191, %v191
    %214 = vst [vmem:[#allocation3 + $0x4] sm:$0xf] %v212
    %215 = vst [vmem:[#allocation3 + $0x18] sm:$0xf] %v213
    %v216 = vpack.c.bf16 %v194, %v194
    %v217 = vpack.c.bf16 %v196, %v196
    %218 = vst [vmem:[#allocation3 + $0x8] sm:$0xf] %v216
    %219 = vst [vmem:[#allocation3 + $0x1c] sm:$0xf] %v217
    %v220 = vpack.c.bf16 %v199, %v199
    %v221 = vpack.c.bf16 %v201, %v201
    %222 = vst [vmem:[#allocation3 + $0xc] sm:$0xf] %v220
    %223 = vst [vmem:[#allocation3 + $0x20] sm:$0xf] %v221
    %v224 = vpack.c.bf16 %v204, %v204
    %v225 = vpack.c.bf16 %v206, %v206
    %226 = vst [vmem:[#allocation3 + $0x10] sm:$0xf] %v224
    %227 = vst [vmem:[#allocation3 + $0x24] sm:$0xf] %v225
    %v228 = vld [vmem:[%s1] sm:$0x7]
    %v229 = vld [vmem:[#allocation3] sm:$0xff]
    %v230 = vld [vmem:[#allocation3 + $0x8] sm:$0xff]
    %v231 = vld [vmem:[#allocation3 + $0x10] sm:$0xf]
    %v232 = vld [vmem:[#allocation3 + $0x14] sm:$0xff]
    %v233 = vld [vmem:[#allocation3 + $0x1c] sm:$0xff]
    %v234 = vld [vmem:[#allocation3 + $0x24] sm:$0xf]
    %v241 = vunpack.c.l.b16 %v229
    %v242 = vunpack.c.h.b16 %v229
    %v243 = vunpack.c.l.b16 %v230
    %v244 = vunpack.c.h.b16 %v230
    %v245 = vunpack.c.l.b16 %v231
    %v246 = vunpack.c.l.b16 %v232
    %v247 = vunpack.c.h.b16 %v232
    %v248 = vunpack.c.l.b16 %v233
    %v249 = vunpack.c.h.b16 %v233
    %v250 = vunpack.c.l.b16 %v234
    %v251 = vpack.c.b16 %v246, %v241
    %v252 = vpack.c.b16 %v247, %v242
    %v253 = vpack.c.b16 %v248, %v243
    %v254 = vpack.c.b16 %v249, %v244
    %v255 = vpack.c.b16 %v250, %v245
    %vm261 = vcmask 130048
    %v263 = vsel %vm261, %v228, 0
    %265 = vmatpush.bf16.msra.mxu0 0
    %266 = vmatpush.bf16.msra.mxu0 0
    %267 = vmatpush.bf16.msra.mxu0 0
    %268 = vmatpush.bf16.msra.mxu0 0
    %269 = vmatpush.bf16.msra.mxu0 0
    %270 = vmatpush.bf16.msra.mxu0 0
    %271 = vmatpush.bf16.msra.mxu0 0
    %272 = vmatpush.bf16.msra.mxu0 %v251
    %273 = vmatmul.bf16.gmra.mxu0 %v263
    %v274 = vpop.f32.mrf.mxu0
    %v275 = vadd.f32 0.0, %v274
    %v276 = vpop.f32.mrf.mxu0
    %277 = vdwg.mxu0
    %278 = vmatpush.bf16.msra.mxu0 0
    %279 = vmatpush.bf16.msra.mxu0 0
    %280 = vmatpush.bf16.msra.mxu0 0
    %281 = vmatpush.bf16.msra.mxu0 0
    %282 = vmatpush.bf16.msra.mxu0 0
    %283 = vmatpush.bf16.msra.mxu0 0
    %284 = vmatpush.bf16.msra.mxu0 0
    %285 = vmatpush.bf16.msra.mxu0 %v252
    %286 = vmatmul.bf16.gmra.mxu0 %v263
    %v287 = vpop.f32.mrf.mxu0
    %v288 = vadd.f32 0.0, %v287
    %v289 = vpop.f32.mrf.mxu0
    %290 = vdwg.mxu0
    %291 = vmatpush.bf16.msra.mxu0 0
    %292 = vmatpush.bf16.msra.mxu0 0
    %293 = vmatpush.bf16.msra.mxu0 0
    %294 = vmatpush.bf16.msra.mxu0 0
    %295 = vmatpush.bf16.msra.mxu0 0
    %296 = vmatpush.bf16.msra.mxu0 0
    %297 = vmatpush.bf16.msra.mxu0 0
    %298 = vmatpush.bf16.msra.mxu0 %v253
    %299 = vmatmul.bf16.gmra.mxu0 %v263
    %v300 = vpop.f32.mrf.mxu0
    %v301 = vadd.f32 0.0, %v300
    %v302 = vpop.f32.mrf.mxu0
    %303 = vdwg.mxu0
    %304 = vmatpush.bf16.msra.mxu0 0
    %305 = vmatpush.bf16.msra.mxu0 0
    %306 = vmatpush.bf16.msra.mxu0 0
    %307 = vmatpush.bf16.msra.mxu0 0
    %308 = vmatpush.bf16.msra.mxu0 0
    %309 = vmatpush.bf16.msra.mxu0 0
    %310 = vmatpush.bf16.msra.mxu0 0
    %311 = vmatpush.bf16.msra.mxu0 %v254
    %312 = vmatmul.bf16.gmra.mxu0 %v263
    %v313 = vpop.f32.mrf.mxu0
    %v314 = vadd.f32 0.0, %v313
    %v315 = vpop.f32.mrf.mxu0
    %316 = vdwg.mxu0
    %317 = vmatpush.bf16.msra.mxu0 0
    %318 = vmatpush.bf16.msra.mxu0 0
    %319 = vmatpush.bf16.msra.mxu0 0
    %320 = vmatpush.bf16.msra.mxu0 0
    %321 = vmatpush.bf16.msra.mxu0 0
    %322 = vmatpush.bf16.msra.mxu0 0
    %323 = vmatpush.bf16.msra.mxu0 0
    %324 = vmatpush.bf16.msra.mxu0 %v255
    %325 = vmatmul.bf16.gmra.mxu0 %v263
    %v326 = vpop.f32.mrf.mxu0
    %v327 = vadd.f32 0.0, %v326
    %v328 = vpop.f32.mrf.mxu0
    %329 = vdwg.mxu0
    %v330 = vmul.f32 %v275, %v288
    %v331 = vmul.f32 %v275, %v275
    %v332 = vmul.f32 %v288, %v288
    %v333 = vmul.f32 %v330, 2.0
    %v334 = vstv %s38
    %v335 = vadd.f32 %v333, %v334
    %v336 = vsub.f32 %v327, %v330
    %v337 = vmul.f32 %v336, 2.0
    %v338 = vstv %s39
    %v339 = vadd.f32 %v337, %v338
    %v340 = vmul.f32 %v335, %v339
    %v341 = vadd.f32 %v331, %v332
    %v342 = vadd.f32 %v341, %v334
    %v343 = vsub.f32 %v301, %v331
    %v344 = vsub.f32 %v314, %v332
    %v345 = vadd.f32 %v343, %v344
    %v346 = vadd.f32 %v345, %v338
    %v347 = vmul.f32 %v342, %v346
    %v348 = vrcp.pop %v347
    %v349 = vmul.f32 %v347, %v348
    %v350 = vsub.f32 1.0, %v349
    %v351 = vmul.f32 %v348, %v350
    %v352 = vadd.f32 %v348, %v351
    %vm353 = vweird.f32 %v347
    %vm354 = vweird.f32 %v348
    %vm355 = vmor %vm353, %vm354
    %v356 = vsel %vm355, %v348, %v352
    %v357 = vand.u32 2147483647, %v347
    %vm358 = vcmp.eq.f32.partialorder %v357, 8.507059e+37
    %v359 = vand.u32 %v347, 2147483648
    %v360 = vor.u32 1.1754944e-38, %v359
    %v361 = vsel %vm358, %v360, %v356
    %v362 = vmul.f32 %v340, %v361
    %v363 = vld [vmem:[%s3] sm:$0x1]
    %v365 = vperm.slane %v363, 0
    %v367 = vmul.f32 %v362, %v365
    %vm368 = vcmask 1045504
    %v369 = vsel %vm368, %v367, 0.0
    %370 = vadd.xlane.f32.xlu0 %v369
    %v371 = vpop.xlane.xlu0 %370
    %v372 = vrot.slane %v371, 4
    %v373 = vadd.f32 %v371, %v372
    %v374 = vrot.slane %v373, 2
    %v375 = vadd.f32 %v373, %v374
    %v376 = vrot.slane %v375, 1
    %v377 = vadd.f32 %v375, %v376
    %s378 = vtos %v377
    %s379 = scalar_lea.smem [#allocation7], 0
    %380 = sst [smem:[%s379]] %s378
    // Predicated region
    $region30: #{ssim_pallas.1} parent=1 // pred_check
      _
    $region31: #{ssim_pallas.1} parent=1 // pred_check_branch
      %382 = sbr.rel (0) target = $region33
    $region32: #{ssim_pallas.1} parent=1 // pred_region
      %384 = vsyncadd [#allocation5], 0
      %s386 = sshll.u32 %s6, 4
      %s387 = int_to_ptr.hbm [resolvable:$true] %s386
      %389 = dma.smem_to_hbm [#allocation7], 16, %s387, [#allocation5]
    $region33: #{ssim_pallas.1} parent=1 // pred_fallthru
      _
    // Predicated region
    $region34: #{ssim_pallas.1} parent=1 // pred_check
      _
    $region35: #{ssim_pallas.1} parent=1 // pred_check_branch
      %391 = sbr.rel (0) target = $region37
    $region36: #{ssim_pallas.1} parent=1 // pred_region
      %393 = dma.done [#allocation5], 16
    $region37: #{ssim_pallas.1} parent=1 // pred_fallthru
      _
    %394 = sfence
    %395 = vsyncpa [#allocation5], 1
    %396 = vsyncpa [#allocation6], 1

</llo_original>
